<compile_context>
chip_gen: v7x
topology: tpu7x:2x2x1
jax: 0.10.0
libtpu: 0.0.40
codegen_flags: <defaults>
</compile_context>

<pallas_src>
import functools

import jax
import jax.numpy as jnp
from jax import lax
from jax.experimental import pallas as pl
from jax.experimental.pallas import tpu as pltpu


def _round_up(a, b):
    return -(-a // b) * b


def _pinn_kernel(x_ref, w1_ref, b1_ref, w2_ref, b2_ref,
                 w3_ref, b3_ref, w4_ref, b4_ref, o_ref, *, cn, n_chunks):
    """Fused 4-layer MLP, batch on the lane axis.

    x_ref : (1, tn)      batch tile of time points (lane-dense)
    wN    : (Fout, Fin)  full weight matrices, resident in VMEM
    bN    : (Fout, 1)    biases (broadcast over lanes)
    o_ref : (4, tn)      lane-dense output tile

    The tile is processed in n_chunks sub-chunks of cn lanes each so the
    (64, cn) f32 intermediates fit in the 64-vreg register file.
    """
    # Hoist (tiny) weight/bias loads out of the chunk loop.
    w1 = w1_ref[...]
    b1 = b1_ref[...]
    w2 = w2_ref[...]
    b2 = b2_ref[...]
    w3 = w3_ref[...]
    b3 = b3_ref[...]
    w4 = w4_ref[...]
    b4 = b4_ref[...]

    def chunk(c, carry):
        off = pl.multiple_of(c * cn, cn)           # lane-aligned chunk offset
        x = x_ref[:, pl.ds(off, cn)]               # (1, cn)

        # Layer 1: in_features == 1 -> outer product on the VPU
        # (broadcast multiply-add), not a K=1 padded MXU matmul.
        h = jnp.tanh(w1 * x + b1)                                        # (64, cn)

        h = jnp.tanh(jnp.dot(w2, h, preferred_element_type=jnp.float32)
                     + b2)                                               # (32, cn)
        h = jnp.tanh(jnp.dot(w3, h, preferred_element_type=jnp.float32)
                     + b3)                                               # (16, cn)
        h = jnp.dot(w4, h, preferred_element_type=jnp.float32) + b4      # (4, cn)

        o_ref[:, pl.ds(off, cn)] = h.astype(o_ref.dtype)
        return carry

    lax.fori_loop(0, n_chunks, chunk, None, unroll=True)


def _choose_tiles(N, tn, cn):
    """Pick (tn, cn): cn multiple of 128, tn multiple of cn, and >=2 grid
    steps whenever the batch allows it (v7x two-TC sharding)."""
    cn = max(128, (cn // 128) * 128)
    tn = max(cn, (tn // cn) * cn)
    if N > cn:
        # Ensure at least 2 grid steps so "parallel" semantics can use both
        # TensorCores on v7x; weights are tiny so per-TC duplication is free.
        tn = min(tn, _round_up(_round_up(N, 2) // 2, cn))
    else:
        tn = cn
    return tn, cn


def pinn_forward(x, params, *, tn=2048, cn=512, feature_major=False):
    """x: (N, 1) float32 time points.

    params: list of (W, b) in PyTorch nn.Linear layout, W: (out, in), b: (out,).
    tn: batch tile along the lane axis (sweep 1024/2048/4096 for large N).
    cn: in-kernel lane sub-chunk (use 256 on v5e).
    feature_major: if True, return the (4, N) feature-major layout directly
        (lets downstream PINN loss code skip the transpose); default returns
        (N, 4) to match the PyTorch module.
    """
    (w1, b1), (w2, b2), (w3, b3), (w4, b4) = params
    N = int(x.shape[0])

    tn, cn = _choose_tiles(N, tn, cn)
    n_pad = _round_up(N, tn)
    n_chunks = tn // cn

    # Pad the flattened input (cheap jnp.pad; no fill + scatter pass).
    x_flat = x.reshape(-1).astype(jnp.float32)
    x_t = jnp.pad(x_flat, (0, n_pad - N)).reshape(1, n_pad)

    # Biases as (Fout, 1) columns so they broadcast over the lane (batch) axis.
    b1c = b1.reshape(-1, 1).astype(jnp.float32)
    b2c = b2.reshape(-1, 1).astype(jnp.float32)
    b3c = b3.reshape(-1, 1).astype(jnp.float32)
    b4c = b4.reshape(-1, 1).astype(jnp.float32)
    w1f = w1.astype(jnp.float32)
    w2f = w2.astype(jnp.float32)
    w3f = w3.astype(jnp.float32)
    w4f = w4.astype(jnp.float32)

    # Full-array blocks with a constant index_map -> resident in VMEM.
    def full_spec(arr):
        return pl.BlockSpec(arr.shape, lambda i: (0, 0))

    kernel = functools.partial(_pinn_kernel, cn=cn, n_chunks=n_chunks)

    out_t = pl.pallas_call(
        kernel,
        out_shape=jax.ShapeDtypeStruct((4, n_pad), jnp.float32),
        grid_spec=pltpu.PrefetchScalarGridSpec(
            num_scalar_prefetch=0,
            grid=(n_pad // tn,),
            in_specs=[
                pl.BlockSpec((1, tn), lambda i: (0, i)),   # x tile over batch
                full_spec(w1f), full_spec(b1c),
                full_spec(w2f), full_spec(b2c),
                full_spec(w3f), full_spec(b3c),
                full_spec(w4f), full_spec(b4c),
            ],
            out_specs=pl.BlockSpec((4, tn), lambda i: (0, i)),
        ),
        compiler_params=pltpu.CompilerParams(
            dimension_semantics=("parallel",)),
    )(x_t, w1f, b1c, w2f, b2c, w3f, b3c, w4f, b4c)

    out_t = out_t[:, :N]          # slice padded lanes before any transpose
    if feature_major:
        return out_t              # (4, N)
    return out_t.T                # (N, 4) - PyTorch forward() semantics


def init_params(key):
    """Deterministic init mimicking PyTorch nn.Linear default
    (uniform(-1/sqrt(fan_in), 1/sqrt(fan_in))), weights in (out, in) layout."""
    dims = [(1, 64), (64, 32), (32, 16), (16, 4)]
    params = []
    for (fan_in, fan_out) in dims:
        key, kw, kb = jax.random.split(key, 3)
        bound = 1.0 / (fan_in ** 0.5)
        w = jax.random.uniform(kw, (fan_out, fan_in), jnp.float32,
                               minval=-bound, maxval=bound)
        b = jax.random.uniform(kb, (fan_out,), jnp.float32,
                               minval=-bound, maxval=bound)
        params.append((w, b))
    return params


def pinn_forward_ref(x, params):
    """Pure-JAX reference (PyTorch layout: h = x @ W.T + b)."""
    (w1, b1), (w2, b2), (w3, b3), (w4, b4) = params
    hp = jax.lax.Precision.HIGHEST
    h = jnp.tanh(jnp.dot(x, w1.T, precision=hp) + b1)
    h = jnp.tanh(jnp.dot(h, w2.T, precision=hp) + b2)
    h = jnp.tanh(jnp.dot(h, w3.T, precision=hp) + b3)
    return jnp.dot(h, w4.T, precision=hp) + b4


if __name__ == "__main__":
    key = jax.random.PRNGKey(0)
    kparam, kdata1, kdata2 = jax.random.split(key, 3)

    params = init_params(kparam)

    # --- Test 1: small batch (single grid step), default tiling -------------
    N1 = 16
    t1 = jax.random.uniform(kdata1, (N1, 1), jnp.float32)
    out1 = jax.block_until_ready(pinn_forward(t1, params))
    ref1 = pinn_forward_ref(t1, params)
    assert out1.shape == (N1, 4)
    assert jnp.allclose(out1, ref1, atol=1e-4, rtol=1e-4), "mismatch (small N)"

    # --- Test 2: N > tile -> multi grid step, multi in-kernel chunk, padded
    # ragged tail, weight residency across steps --------------------------
    N2 = 3000
    t2 = jax.random.uniform(kdata2, (N2, 1), jnp.float32)
    out2 = jax.block_until_ready(pinn_forward(t2, params, tn=2048, cn=512))
    ref2 = pinn_forward_ref(t2, params)
    assert out2.shape == (N2, 4)
    assert jnp.allclose(out2, ref2, atol=1e-4, rtol=1e-4), "mismatch (large N)"

    # Feature-major output path (lets PINN loss code skip the transpose).
    out2_fm = jax.block_until_ready(
        pinn_forward(t2, params, tn=2048, cn=512, feature_major=True))
    assert out2_fm.shape == (4, N2)
    assert jnp.allclose(out2_fm.T, out2, atol=0.0, rtol=0.0)

    # TODO(synk): train_step / add_pde_parameters / LBFGS closure (autograd
    # PDE residual losses) are training logic, not part of forward(); not
    # implemented as kernels.
    print("KERNEL_OK")
</pallas_src>

<mosaic_0001>
module attributes {stable_mosaic.version = 11 : i64} {
  func.func @_pinn_kernel(%arg0: i32, %arg1: memref<1x512xf32, #tpu.memory_space<vmem>>, %arg2: memref<64x1xf32, #tpu.memory_space<vmem>>, %arg3: memref<64x1xf32, #tpu.memory_space<vmem>>, %arg4: memref<32x64xf32, #tpu.memory_space<vmem>>, %arg5: memref<32x1xf32, #tpu.memory_space<vmem>>, %arg6: memref<16x32xf32, #tpu.memory_space<vmem>>, %arg7: memref<16x1xf32, #tpu.memory_space<vmem>>, %arg8: memref<4x16xf32, #tpu.memory_space<vmem>>, %arg9: memref<4x1xf32, #tpu.memory_space<vmem>>, %arg10: memref<4x512xf32, #tpu.memory_space<vmem>>) attributes {dimension_semantics = [#tpu.dimension_semantics<parallel>], iteration_bounds = array<i64: 1>, scalar_prefetch = 0 : i64, scratch_operands = 0 : i64, tpu.core_type = #tpu.core_type<tc>, window_params = [{transform_indices = @transform_0, window_bounds = array<i64: 1, 512>}, {pipeline_mode = #tpu.pipeline_mode<synchronous>, transform_indices = @transform_1, window_bounds = array<i64: 64, 1>}, {pipeline_mode = #tpu.pipeline_mode<synchronous>, transform_indices = @transform_2, window_bounds = array<i64: 64, 1>}, {pipeline_mode = #tpu.pipeline_mode<synchronous>, transform_indices = @transform_3, window_bounds = array<i64: 32, 64>}, {pipeline_mode = #tpu.pipeline_mode<synchronous>, transform_indices = @transform_4, window_bounds = array<i64: 32, 1>}, {pipeline_mode = #tpu.pipeline_mode<synchronous>, transform_indices = @transform_5, window_bounds = array<i64: 16, 32>}, {pipeline_mode = #tpu.pipeline_mode<synchronous>, transform_indices = @transform_6, window_bounds = array<i64: 16, 1>}, {pipeline_mode = #tpu.pipeline_mode<synchronous>, transform_indices = @transform_7, window_bounds = array<i64: 4, 16>}, {pipeline_mode = #tpu.pipeline_mode<synchronous>, transform_indices = @transform_8, window_bounds = array<i64: 4, 1>}, {transform_indices = @transform_9, window_bounds = array<i64: 4, 512>}]} {
    %c0 = arith.constant 0 : index
    %c0_0 = arith.constant 0 : index
    %0 = vector.load %arg2[%c0, %c0_0] : memref<64x1xf32, #tpu.memory_space<vmem>>, vector<64x1xf32>
    %c0_1 = arith.constant 0 : index
    %c0_2 = arith.constant 0 : index
    %1 = vector.load %arg3[%c0_1, %c0_2] : memref<64x1xf32, #tpu.memory_space<vmem>>, vector<64x1xf32>
    %c0_3 = arith.constant 0 : index
    %c0_4 = arith.constant 0 : index
    %2 = vector.load %arg4[%c0_3, %c0_4] : memref<32x64xf32, #tpu.memory_space<vmem>>, vector<32x64xf32>
    %c0_5 = arith.constant 0 : index
    %c0_6 = arith.constant 0 : index
    %3 = vector.load %arg5[%c0_5, %c0_6] : memref<32x1xf32, #tpu.memory_space<vmem>>, vector<32x1xf32>
    %c0_7 = arith.constant 0 : index
    %c0_8 = arith.constant 0 : index
    %4 = vector.load %arg6[%c0_7, %c0_8] : memref<16x32xf32, #tpu.memory_space<vmem>>, vector<16x32xf32>
    %c0_9 = arith.constant 0 : index
    %c0_10 = arith.constant 0 : index
    %5 = vector.load %arg7[%c0_9, %c0_10] : memref<16x1xf32, #tpu.memory_space<vmem>>, vector<16x1xf32>
    %c0_11 = arith.constant 0 : index
    %c0_12 = arith.constant 0 : index
    %6 = vector.load %arg8[%c0_11, %c0_12] : memref<4x16xf32, #tpu.memory_space<vmem>>, vector<4x16xf32>
    %c0_13 = arith.constant 0 : index
    %c0_14 = arith.constant 0 : index
    %7 = vector.load %arg9[%c0_13, %c0_14] : memref<4x1xf32, #tpu.memory_space<vmem>>, vector<4x1xf32>
    %c0_i32 = arith.constant 0 : i32
    %c512_i32 = arith.constant 512 : i32
    %8 = arith.muli %c0_i32, %c512_i32 : i32
    %9 = tpu.assume_multiple %8, 512 : i32
    %c0_15 = arith.constant 0 : index
    %10 = arith.index_cast %9 : i32 to index
    %11 = vector.load %arg1[%c0_15, %10] : memref<1x512xf32, #tpu.memory_space<vmem>>, vector<1x512xf32>
    %12 = vector.broadcast %0 : vector<64x1xf32> to vector<64x512xf32>
    %13 = vector.broadcast %11 : vector<1x512xf32> to vector<64x512xf32>
    %14 = arith.mulf %12, %13 : vector<64x512xf32>
    %15 = vector.broadcast %1 : vector<64x1xf32> to vector<64x512xf32>
    %16 = arith.addf %14, %15 : vector<64x512xf32>
    %17 = math.tanh %16 : vector<64x512xf32>
    %cst = arith.constant dense<0.000000e+00> : vector<32x512xf32>
    %18 = tpu.matmul %2, %17, %cst {dimension_numbers = #tpu.dot_dimension_numbers<[1], [0], [0], [1], [0, 0, 1, 1], [], []>} : vector<32x64xf32>, vector<64x512xf32>, vector<32x512xf32> -> vector<32x512xf32>
    %19 = vector.broadcast %3 : vector<32x1xf32> to vector<32x512xf32>
    %20 = arith.addf %18, %19 : vector<32x512xf32>
    %21 = math.tanh %20 : vector<32x512xf32>
    %cst_16 = arith.constant dense<0.000000e+00> : vector<16x512xf32>
    %22 = tpu.matmul %4, %21, %cst_16 {dimension_numbers = #tpu.dot_dimension_numbers<[1], [0], [0], [1], [0, 0, 1, 1], [], []>} : vector<16x32xf32>, vector<32x512xf32>, vector<16x512xf32> -> vector<16x512xf32>
    %23 = vector.broadcast %5 : vector<16x1xf32> to vector<16x512xf32>
    %24 = arith.addf %22, %23 : vector<16x512xf32>
    %25 = math.tanh %24 : vector<16x512xf32>
    %cst_17 = arith.constant dense<0.000000e+00> : vector<4x512xf32>
    %26 = tpu.matmul %6, %25, %cst_17 {dimension_numbers = #tpu.dot_dimension_numbers<[1], [0], [0], [1], [0, 0, 1, 1], [], []>} : vector<4x16xf32>, vector<16x512xf32>, vector<4x512xf32> -> vector<4x512xf32>
    %27 = vector.broadcast %7 : vector<4x1xf32> to vector<4x512xf32>
    %28 = arith.addf %26, %27 : vector<4x512xf32>
    %c0_18 = arith.constant 0 : index
    %29 = arith.index_cast %9 : i32 to index
    %30 = vector.load %arg10[%c0_18, %29] : memref<4x512xf32, #tpu.memory_space<vmem>>, vector<4x512xf32>
    tpu.vector_store %arg10[%c0_18, %29], %28 {strides = array<i32>} : memref<4x512xf32, #tpu.memory_space<vmem>>, vector<4x512xf32>,
    %c1_i32 = arith.constant 1 : i32
    return
  }
  func.func @transform_0(%arg0: i32) -> (i32, i32) {
    %c0_i32 = arith.constant 0 : i32
    %c0_i32_0 = arith.constant 0 : i32
    return %c0_i32, %arg0 : i32, i32
  }
  func.func @transform_1(%arg0: i32) -> (i32, i32) {
    %c0_i32 = arith.constant 0 : i32
    %c0_i32_0 = arith.constant 0 : i32
    %c0_i32_1 = arith.constant 0 : i32
    return %c0_i32, %c0_i32_0 : i32, i32
  }
  func.func @transform_2(%arg0: i32) -> (i32, i32) {
    %c0_i32 = arith.constant 0 : i32
    %c0_i32_0 = arith.constant 0 : i32
    %c0_i32_1 = arith.constant 0 : i32
    return %c0_i32, %c0_i32_0 : i32, i32
  }
  func.func @transform_3(%arg0: i32) -> (i32, i32) {
    %c0_i32 = arith.constant 0 : i32
    %c0_i32_0 = arith.constant 0 : i32
    %c0_i32_1 = arith.constant 0 : i32
    return %c0_i32, %c0_i32_0 : i32, i32
  }
  func.func @transform_4(%arg0: i32) -> (i32, i32) {
    %c0_i32 = arith.constant 0 : i32
    %c0_i32_0 = arith.constant 0 : i32
    %c0_i32_1 = arith.constant 0 : i32
    return %c0_i32, %c0_i32_0 : i32, i32
  }
  func.func @transform_5(%arg0: i32) -> (i32, i32) {
    %c0_i32 = arith.constant 0 : i32
    %c0_i32_0 = arith.constant 0 : i32
    %c0_i32_1 = arith.constant 0 : i32
    return %c0_i32, %c0_i32_0 : i32, i32
  }
  func.func @transform_6(%arg0: i32) -> (i32, i32) {
    %c0_i32 = arith.constant 0 : i32
    %c0_i32_0 = arith.constant 0 : i32
    %c0_i32_1 = arith.constant 0 : i32
    return %c0_i32, %c0_i32_0 : i32, i32
  }
  func.func @transform_7(%arg0: i32) -> (i32, i32) {
    %c0_i32 = arith.constant 0 : i32
    %c0_i32_0 = arith.constant 0 : i32
    %c0_i32_1 = arith.constant 0 : i32
    return %c0_i32, %c0_i32_0 : i32, i32
  }
  func.func @transform_8(%arg0: i32) -> (i32, i32) {
    %c0_i32 = arith.constant 0 : i32
    %c0_i32_0 = arith.constant 0 : i32
    %c0_i32_1 = arith.constant 0 : i32
    return %c0_i32, %c0_i32_0 : i32, i32
  }
  func.func @transform_9(%arg0: i32) -> (i32, i32) {
    %c0_i32 = arith.constant 0 : i32
    %c0_i32_0 = arith.constant 0 : i32
    return %c0_i32, %arg0 : i32, i32
  }
}

</mosaic_0001>

<llo_original>
// kernel: tpu_custom_call.1
$region0: #{tpu_custom_call.1}
  #allocation0 [shape = 'u32[]', space=smem, size = 0x4, offset = 0x4, fixed_abs, tag = 'smem constant byte address 0x4 - core index']
  #allocation1 [shape = 'u32[144,128]{1,0:T(1,128)}', space=vmem, size = 0x12000, scoped, tag = 'internal scratch']
  %s0 = inlined_call_operand.vmem [shape: f32[1,512], index: 0, kind: input, shape index: {}]
  %s1 = inlined_call_operand.vmem [shape: f32[64,1], index: 1, kind: input, shape index: {}]
  %s2 = inlined_call_operand.vmem [shape: f32[64,1], index: 2, kind: input, shape index: {}]
  %s3 = inlined_call_operand.vmem [shape: f32[32,64], index: 3, kind: input, shape index: {}]
  %s4 = inlined_call_operand.vmem [shape: f32[32,1], index: 4, kind: input, shape index: {}]
  %s5 = inlined_call_operand.vmem [shape: f32[16,32], index: 5, kind: input, shape index: {}]
  %s6 = inlined_call_operand.vmem [shape: f32[16,1], index: 6, kind: input, shape index: {}]
  %s7 = inlined_call_operand.vmem [shape: f32[4,16], index: 7, kind: input, shape index: {}]
  %s8 = inlined_call_operand.vmem [shape: f32[4,1], index: 8, kind: input, shape index: {}]
  %s9 = inlined_call_operand.hbm [shape: f32[4,512], index: 9, kind: output, shape index: {}]
  %s10 = sld [smem:[#allocation0]]
  $region46: #{tpu_custom_call.1} parent=0
    _
  %s12 = ssub.s32 1, %s10
  %s13 = scalar_select 0, %s12, %s10
  $region1: #{tpu_custom_call.1} parent=0
    #allocation2 [shape = 'u8[8192]{0}', space=vmem, size = 0x2000, scoped, tag = 'output window, operand 0, single buffered']
    #allocation3 [shape = 's32[1]{0}', space=sflag, size = 0x4, scoped, tag = 'scoped memory for tpu_custom_call.1']
    %14 = vsyncpa [#allocation3], 0
    // Predicated region
    $region2: #{tpu_custom_call.1} parent=1 // pred_check
      _
    $region3: #{tpu_custom_call.1} parent=1 // pred_check_branch
      %16 = sbr.rel (0) target = $region5
    $region4: #{tpu_custom_call.1} parent=1 // pred_region
      _
    $region5: #{tpu_custom_call.1} parent=1 // pred_fallthru
      _
    // Predicated region
    $region6: #{tpu_custom_call.1} parent=1 // pred_check
      _
    $region7: #{tpu_custom_call.1} parent=1 // pred_check_branch
      %18 = sbr.rel (0) target = $region9
    $region8: #{tpu_custom_call.1} parent=1 // pred_region
      _
    $region9: #{tpu_custom_call.1} parent=1 // pred_fallthru
      _
    // Predicated region
    $region10: #{tpu_custom_call.1} parent=1 // pred_check
      _
    $region11: #{tpu_custom_call.1} parent=1 // pred_check_branch
      %20 = sbr.rel (0) target = $region13
    $region12: #{tpu_custom_call.1} parent=1 // pred_region
      _
    $region13: #{tpu_custom_call.1} parent=1 // pred_fallthru
      _
    // Predicated region
    $region14: #{tpu_custom_call.1} parent=1 // pred_check
      _
    $region15: #{tpu_custom_call.1} parent=1 // pred_check_branch
      %22 = sbr.rel (0) target = $region17
    $region16: #{tpu_custom_call.1} parent=1 // pred_region
      _
    $region17: #{tpu_custom_call.1} parent=1 // pred_fallthru
      _
    // Predicated region
    $region18: #{tpu_custom_call.1} parent=1 // pred_check
      _
    $region19: #{tpu_custom_call.1} parent=1 // pred_check_branch
      %24 = sbr.rel (0) target = $region21
    $region20: #{tpu_custom_call.1} parent=1 // pred_region
      _
    $region21: #{tpu_custom_call.1} parent=1 // pred_fallthru
      _
    // Predicated region
    $region22: #{tpu_custom_call.1} parent=1 // pred_check
      _
    $region23: #{tpu_custom_call.1} parent=1 // pred_check_branch
      %26 = sbr.rel (0) target = $region25
    $region24: #{tpu_custom_call.1} parent=1 // pred_region
      _
    $region25: #{tpu_custom_call.1} parent=1 // pred_fallthru
      _
    // Predicated region
    $region26: #{tpu_custom_call.1} parent=1 // pred_check
      _
    $region27: #{tpu_custom_call.1} parent=1 // pred_check_branch
      %28 = sbr.rel (0) target = $region29
    $region28: #{tpu_custom_call.1} parent=1 // pred_region
      _
    $region29: #{tpu_custom_call.1} parent=1 // pred_fallthru
      _
    // Predicated region
    $region30: #{tpu_custom_call.1} parent=1 // pred_check
      _
    $region31: #{tpu_custom_call.1} parent=1 // pred_check_branch
      %30 = sbr.rel (0) target = $region33
    $region32: #{tpu_custom_call.1} parent=1 // pred_region
      _
    $region33: #{tpu_custom_call.1} parent=1 // pred_fallthru
      _
    // Predicated region
    $region34: #{tpu_custom_call.1} parent=1 // pred_check
      _
    $region35: #{tpu_custom_call.1} parent=1 // pred_check_branch
      %32 = sbr.rel (0) target = $region37
    $region36: #{tpu_custom_call.1} parent=1 // pred_region
      _
    $region37: #{tpu_custom_call.1} parent=1 // pred_fallthru
      _
    %v33 = vld [vmem:[%s1] sm:$0xff]
    %v34 = vld [vmem:[%s1 + $0x8] sm:$0xff]
    %v35 = vld [vmem:[%s1 + $0x10] sm:$0xff]
    %v36 = vld [vmem:[%s1 + $0x18] sm:$0xff]
    %v37 = vld [vmem:[%s1 + $0x20] sm:$0xff]
    %v38 = vld [vmem:[%s1 + $0x28] sm:$0xff]
    %v39 = vld [vmem:[%s1 + $0x30] sm:$0xff]
    %v40 = vld [vmem:[%s1 + $0x38] sm:$0xff]
    %v41 = vld [vmem:[%s2] sm:$0xff]
    %v42 = vld [vmem:[%s2 + $0x8] sm:$0xff]
    %v43 = vld [vmem:[%s2 + $0x10] sm:$0xff]
    %v44 = vld [vmem:[%s2 + $0x18] sm:$0xff]
    %v45 = vld [vmem:[%s2 + $0x20] sm:$0xff]
    %v46 = vld [vmem:[%s2 + $0x28] sm:$0xff]
    %v47 = vld [vmem:[%s2 + $0x30] sm:$0xff]
    %v48 = vld [vmem:[%s2 + $0x38] sm:$0xff]
    %v49 = vld [vmem:[%s3] sm:$0xff]
    %v50 = vld [vmem:[%s3 + $0x8] sm:$0xff]
    %v51 = vld [vmem:[%s3 + $0x10] sm:$0xff]
    %v52 = vld [vmem:[%s3 + $0x18] sm:$0xff]
    %v53 = vld [vmem:[%s4] sm:$0xff]
    %v54 = vld [vmem:[%s4 + $0x8] sm:$0xff]
    %v55 = vld [vmem:[%s4 + $0x10] sm:$0xff]
    %v56 = vld [vmem:[%s4 + $0x18] sm:$0xff]
    %v57 = vld [vmem:[%s5] sm:$0xff]
    %v58 = vld [vmem:[%s5 + $0x8] sm:$0xff]
    %v59 = vld [vmem:[%s6] sm:$0xff]
    %v60 = vld [vmem:[%s6 + $0x8] sm:$0xff]
    %v61 = vld [vmem:[%s7] sm:$0xf]
    %v62 = vld [vmem:[%s8] sm:$0xf]
    %v63 = vld [vmem:[%s0] sm:$0xf]
    %65 = vset.pattern.permute.xlu0 0
    %66 = vperm.xlu0 %65, %v33
    %v67 = vpop.permute.xlu0 %66
    %70 = vset.pattern.permute.xlu0 0
    %71 = vperm.xlu0 %70, %v34
    %v72 = vpop.permute.xlu0 %71
    %75 = vset.pattern.permute.xlu0 0
    %76 = vperm.xlu0 %75, %v35
    %v77 = vpop.permute.xlu0 %76
    %80 = vset.pattern.permute.xlu0 0
    %81 = vperm.xlu0 %80, %v36
    %v82 = vpop.permute.xlu0 %81
    %85 = vset.pattern.permute.xlu0 0
    %86 = vperm.xlu0 %85, %v37
    %v87 = vpop.permute.xlu0 %86
    %90 = vset.pattern.permute.xlu0 0
    %91 = vperm.xlu0 %90, %v38
    %v92 = vpop.permute.xlu0 %91
    %95 = vset.pattern.permute.xlu0 0
    %96 = vperm.xlu0 %95, %v39
    %v97 = vpop.permute.xlu0 %96
    %100 = vset.pattern.permute.xlu0 0
    %101 = vperm.xlu0 %100, %v40
    %v102 = vpop.permute.xlu0 %101
    %v105 = vlaneseq
    %v106 = vshrl.u32 %v105, 7
    %v107 = vsub.s32 0, %v106
    %v108 = vrot.slane %v63, %v107
    %v109 = vlaneseq
    %v110 = vshrl.u32 %v109, 7
    %v111 = vsub.s32 1, %v110
    %v112 = vrot.slane %v63, %v111
    %v113 = vlaneseq
    %v114 = vshrl.u32 %v113, 7
    %v115 = vsub.s32 2, %v114
    %v116 = vrot.slane %v63, %v115
    %v117 = vlaneseq
    %v118 = vshrl.u32 %v117, 7
    %v119 = vsub.s32 3, %v118
    %v120 = vrot.slane %v63, %v119
    %v125 = vmul.f32 %v67, %v108
    %v126 = vmul.f32 %v67, %v112
    %v127 = vmul.f32 %v67, %v116
    %v128 = vmul.f32 %v67, %v120
    %v129 = vmul.f32 %v72, %v108
    %v130 = vmul.f32 %v72, %v112
    %v131 = vmul.f32 %v72, %v116
    %v132 = vmul.f32 %v72, %v120
    %v133 = vmul.f32 %v77, %v108
    %v134 = vmul.f32 %v77, %v112
    %v135 = vmul.f32 %v77, %v116
    %v136 = vmul.f32 %v77, %v120
    %v137 = vmul.f32 %v82, %v108
    %v138 = vmul.f32 %v82, %v112
    %v139 = vmul.f32 %v82, %v116
    %v140 = vmul.f32 %v82, %v120
    %v141 = vmul.f32 %v87, %v108
    %v142 = vmul.f32 %v87, %v112
    %v143 = vmul.f32 %v87, %v116
    %v144 = vmul.f32 %v87, %v120
    %v145 = vmul.f32 %v92, %v108
    %v146 = vmul.f32 %v92, %v112
    %v147 = vmul.f32 %v92, %v116
    %v148 = vmul.f32 %v92, %v120
    %v149 = vmul.f32 %v97, %v108
    %v150 = vmul.f32 %v97, %v112
    %v151 = vmul.f32 %v97, %v116
    %v152 = vmul.f32 %v97, %v120
    %v153 = vmul.f32 %v102, %v108
    %v154 = vmul.f32 %v102, %v112
    %v155 = vmul.f32 %v102, %v116
    %v156 = vmul.f32 %v102, %v120
    %158 = vset.pattern.permute.xlu0 0
    %159 = vperm.xlu0 %158, %v41
    %v160 = vpop.permute.xlu0 %159
    %163 = vset.pattern.permute.xlu0 0
    %164 = vperm.xlu0 %163, %v42
    %v165 = vpop.permute.xlu0 %164
    %168 = vset.pattern.permute.xlu0 0
    %169 = vperm.xlu0 %168, %v43
    %v170 = vpop.permute.xlu0 %169
    %173 = vset.pattern.permute.xlu0 0
    %174 = vperm.xlu0 %173, %v44
    %v175 = vpop.permute.xlu0 %174
    %178 = vset.pattern.permute.xlu0 0
    %179 = vperm.xlu0 %178, %v45
    %v180 = vpop.permute.xlu0 %179
    %183 = vset.pattern.permute.xlu0 0
    %184 = vperm.xlu0 %183, %v46
    %v185 = vpop.permute.xlu0 %184
    %188 = vset.pattern.permute.xlu0 0
    %189 = vperm.xlu0 %188, %v47
    %v190 = vpop.permute.xlu0 %189
    %193 = vset.pattern.permute.xlu0 0
    %194 = vperm.xlu0 %193, %v48
    %v195 = vpop.permute.xlu0 %194
    %v197 = vadd.f32 %v125, %v160
    %v198 = vadd.f32 %v126, %v160
    %v199 = vadd.f32 %v127, %v160
    %v200 = vadd.f32 %v128, %v160
    %v201 = vadd.f32 %v129, %v165
    %v202 = vadd.f32 %v130, %v165
    %v203 = vadd.f32 %v131, %v165
    %v204 = vadd.f32 %v132, %v165
    %v205 = vadd.f32 %v133, %v170
    %v206 = vadd.f32 %v134, %v170
    %v207 = vadd.f32 %v135, %v170
    %v208 = vadd.f32 %v136, %v170
    %v209 = vadd.f32 %v137, %v175
    %v210 = vadd.f32 %v138, %v175
    %v211 = vadd.f32 %v139, %v175
    %v212 = vadd.f32 %v140, %v175
    %v213 = vadd.f32 %v141, %v180
    %v214 = vadd.f32 %v142, %v180
    %v215 = vadd.f32 %v143, %v180
    %v216 = vadd.f32 %v144, %v180
    %v217 = vadd.f32 %v145, %v185
    %v218 = vadd.f32 %v146, %v185
    %v219 = vadd.f32 %v147, %v185
    %v220 = vadd.f32 %v148, %v185
    %v221 = vadd.f32 %v149, %v190
    %v222 = vadd.f32 %v150, %v190
    %v223 = vadd.f32 %v151, %v190
    %v224 = vadd.f32 %v152, %v190
    %v225 = vadd.f32 %v153, %v195
    %v226 = vadd.f32 %v154, %v195
    %v227 = vadd.f32 %v155, %v195
    %v228 = vadd.f32 %v156, %v195
    %v229 = vtanh.pop %v197
    %v230 = vtanh.pop %v198
    %v231 = vtanh.pop %v199
    %v232 = vtanh.pop %v200
    %v233 = vtanh.pop %v201
    %v234 = vtanh.pop %v202
    %v235 = vtanh.pop %v203
    %v236 = vtanh.pop %v204
    %v237 = vtanh.pop %v205
    %v238 = vtanh.pop %v206
    %v239 = vtanh.pop %v207
    %v240 = vtanh.pop %v208
    %v241 = vtanh.pop %v209
    %v242 = vtanh.pop %v210
    %v243 = vtanh.pop %v211
    %v244 = vtanh.pop %v212
    %v245 = vtanh.pop %v213
    %v246 = vtanh.pop %v214
    %v247 = vtanh.pop %v215
    %v248 = vtanh.pop %v216
    %v249 = vtanh.pop %v217
    %v250 = vtanh.pop %v218
    %v251 = vtanh.pop %v219
    %v252 = vtanh.pop %v220
    %v253 = vtanh.pop %v221
    %v254 = vtanh.pop %v222
    %v255 = vtanh.pop %v223
    %v256 = vtanh.pop %v224
    %v257 = vtanh.pop %v225
    %v258 = vtanh.pop %v226
    %v259 = vtanh.pop %v227
    %v260 = vtanh.pop %v228
    %262 = vset.pattern.permute.xlu0 0
    %263 = vperm.xlu0 %262, %v53
    %v264 = vpop.permute.xlu0 %263
    %267 = vset.pattern.permute.xlu0 0
    %268 = vperm.xlu0 %267, %v54
    %v269 = vpop.permute.xlu0 %268
    %272 = vset.pattern.permute.xlu0 0
    %273 = vperm.xlu0 %272, %v55
    %v274 = vpop.permute.xlu0 %273
    %277 = vset.pattern.permute.xlu0 0
    %278 = vperm.xlu0 %277, %v56
    %v279 = vpop.permute.xlu0 %278
    %vm281 = vcmask 523264
    %v283 = vsel %vm281, %v49, 0
    %v286 = vsel %vm281, %v50, 0
    %v289 = vsel %vm281, %v51, 0
    %v292 = vsel %vm281, %v52, 0
    %294 = vmatprep.subr.mxu0 %v230
    %295 = vmatpush1.msra.mxu0 %v229
    %296 = vmatprep.subr.mxu0 %v234
    %297 = vmatpush1.msra.mxu0 %v233
    %298 = vmatprep.subr.mxu0 %v238
    %299 = vmatpush1.msra.mxu0 %v237
    %300 = vmatprep.subr.mxu0 %v242
    %301 = vmatpush1.msra.mxu0 %v241
    %302 = vmatprep.subr.mxu0 %v246
    %303 = vmatpush1.msra.mxu0 %v245
    %304 = vmatprep.subr.mxu0 %v250
    %305 = vmatpush1.msra.mxu0 %v249
    %306 = vmatprep.subr.mxu0 %v254
    %307 = vmatpush1.msra.mxu0 %v253
    %308 = vmatprep.subr.mxu0 %v258
    %309 = vmatpush1.msra.mxu0 %v257
    %310 = vmatprep.subr.mxu0 0.0
    %311 = vmatpush1.msra.mxu0 0.0
    %312 = vmatprep.subr.mxu0 0.0
    %313 = vmatpush1.msra.mxu0 0.0
    %314 = vmatprep.subr.mxu0 0.0
    %315 = vmatpush1.msra.mxu0 0.0
    %316 = vmatprep.subr.mxu0 0.0
    %317 = vmatpush1.msra.mxu0 0.0
    %318 = vmatprep.subr.mxu0 0.0
    %319 = vmatpush1.msra.mxu0 0.0
    %320 = vmatprep.subr.mxu0 0.0
    %321 = vmatpush1.msra.mxu0 0.0
    %322 = vmatprep.subr.mxu0 0.0
    %323 = vmatpush1.msra.mxu0 0.0
    %324 = vmatprep.subr.mxu0 0.0
    %325 = vmatpush1.msra.mxu0 0.0
    %326 = vmatprep.subr.mxu0 0.0
    %327 = vmatpush1.msra.mxu0 0.0
    %328 = vmatprep.subr.mxu0 0.0
    %329 = vmatpush1.msra.mxu0 0.0
    %330 = vmatprep.subr.mxu0 0.0
    %331 = vmatpush1.msra.mxu0 0.0
    %332 = vmatprep.subr.mxu0 0.0
    %333 = vmatpush1.msra.mxu0 0.0
    %334 = vmatprep.subr.mxu0 0.0
    %335 = vmatpush1.msra.mxu0 0.0
    %336 = vmatprep.subr.mxu0 0.0
    %337 = vmatpush1.msra.mxu0 0.0
    %338 = vmatprep.subr.mxu0 0.0
    %339 = vmatpush1.msra.mxu0 0.0
    %340 = vmatprep.subr.mxu0 0.0
    %341 = vmatpush1.msra.mxu0 0.0
    %342 = vmatprep.subr.mxu0 0.0
    %343 = vmatpush1.msra.mxu0 0.0
    %344 = vmatprep.subr.mxu0 0.0
    %345 = vmatpush1.msra.mxu0 0.0
    %346 = vmatprep.subr.mxu0 0.0
    %347 = vmatpush1.msra.mxu0 0.0
    %348 = vmatprep.subr.mxu0 0.0
    %349 = vmatpush1.msra.mxu0 0.0
    %350 = vmatprep.subr.mxu0 0.0
    %351 = vmatpush1.msra.mxu0 0.0
    %352 = vmatprep.subr.mxu0 0.0
    %353 = vmatpush1.msra.mxu0 0.0
    %354 = vmatprep.subr.mxu0 0.0
    %355 = vmatpush1.msra.mxu0 0.0
    %356 = vmatprep.subr.mxu0 0.0
    %357 = vmatpush1.msra.mxu0 0.0
    %358 = vmatprep.mubr.f32.mxu0 0.0
    %359 = vmatmul.mubr.f32.gmra.mrb[0].mxu0 %v283
    %v360 = vpop.f32.mrb[0].mxu0
    %v361 = vadd.f32 %v264, %v360
    %v362 = vpop.f32.mrb[0].mxu0
    %v363 = vadd.f32 %v264, %v362
    %364 = vmatprep.mubr.f32.mxu0 0.0
    %365 = vmatmul.mubr.f32.gmra.mrb[0].mxu0 %v286
    %v366 = vpop.f32.mrb[0].mxu0
    %v367 = vadd.f32 %v269, %v366
    %v368 = vpop.f32.mrb[0].mxu0
    %v369 = vadd.f32 %v269, %v368
    %370 = vmatprep.mubr.f32.mxu0 0.0
    %371 = vmatmul.mubr.f32.gmra.mrb[0].mxu0 %v289
    %v372 = vpop.f32.mrb[0].mxu0
    %v373 = vadd.f32 %v274, %v372
    %v374 = vpop.f32.mrb[0].mxu0
    %v375 = vadd.f32 %v274, %v374
    %376 = vmatprep.mubr.f32.mxu0 0.0
    %377 = vmatmul.mubr.f32.gmra.mrb[0].mxu0 %v292
    %v378 = vpop.f32.mrb[0].mxu0
    %v379 = vadd.f32 %v279, %v378
    %v380 = vpop.f32.mrb[0].mxu0
    %v381 = vadd.f32 %v279, %v380
    %382 = vdwg.mxu0
    %383 = vmatprep.subr.mxu0 %v232
    %384 = vmatpush1.msra.mxu0 %v231
    %385 = vmatprep.subr.mxu0 %v236
    %386 = vmatpush1.msra.mxu0 %v235
    %387 = vmatprep.subr.mxu0 %v240
    %388 = vmatpush1.msra.mxu0 %v239
    %389 = vmatprep.subr.mxu0 %v244
    %390 = vmatpush1.msra.mxu0 %v243
    %391 = vmatprep.subr.mxu0 %v248
    %392 = vmatpush1.msra.mxu0 %v247
    %393 = vmatprep.subr.mxu0 %v252
    %394 = vmatpush1.msra.mxu0 %v251
    %395 = vmatprep.subr.mxu0 %v256
    %396 = vmatpush1.msra.mxu0 %v255
    %397 = vmatprep.subr.mxu0 %v260
    %398 = vmatpush1.msra.mxu0 %v259
    %399 = vmatprep.subr.mxu0 0.0
    %400 = vmatpush1.msra.mxu0 0.0
    %401 = vmatprep.subr.mxu0 0.0
    %402 = vmatpush1.msra.mxu0 0.0
    %403 = vmatprep.subr.mxu0 0.0
    %404 = vmatpush1.msra.mxu0 0.0
    %405 = vmatprep.subr.mxu0 0.0
    %406 = vmatpush1.msra.mxu0 0.0
    %407 = vmatprep.subr.mxu0 0.0
    %408 = vmatpush1.msra.mxu0 0.0
    %409 = vmatprep.subr.mxu0 0.0
    %410 = vmatpush1.msra.mxu0 0.0
    %411 = vmatprep.subr.mxu0 0.0
    %412 = vmatpush1.msra.mxu0 0.0
    %413 = vmatprep.subr.mxu0 0.0
    %414 = vmatpush1.msra.mxu0 0.0
    %415 = vmatprep.subr.mxu0 0.0
    %416 = vmatpush1.msra.mxu0 0.0
    %417 = vmatprep.subr.mxu0 0.0
    %418 = vmatpush1.msra.mxu0 0.0
    %419 = vmatprep.subr.mxu0 0.0
    %420 = vmatpush1.msra.mxu0 0.0
    %421 = vmatprep.subr.mxu0 0.0
    %422 = vmatpush1.msra.mxu0 0.0
    %423 = vmatprep.subr.mxu0 0.0
    %424 = vmatpush1.msra.mxu0 0.0
    %425 = vmatprep.subr.mxu0 0.0
    %426 = vmatpush1.msra.mxu0 0.0
    %427 = vmatprep.subr.mxu0 0.0
    %428 = vmatpush1.msra.mxu0 0.0
    %429 = vmatprep.subr.mxu0 0.0
    %430 = vmatpush1.msra.mxu0 0.0
    %431 = vmatprep.subr.mxu0 0.0
    %432 = vmatpush1.msra.mxu0 0.0
    %433 = vmatprep.subr.mxu0 0.0
    %434 = vmatpush1.msra.mxu0 0.0
    %435 = vmatprep.subr.mxu0 0.0
    %436 = vmatpush1.msra.mxu0 0.0
    %437 = vmatprep.subr.mxu0 0.0
    %438 = vmatpush1.msra.mxu0 0.0
    %439 = vmatprep.subr.mxu0 0.0
    %440 = vmatpush1.msra.mxu0 0.0
    %441 = vmatprep.subr.mxu0 0.0
    %442 = vmatpush1.msra.mxu0 0.0
    %443 = vmatprep.subr.mxu0 0.0
    %444 = vmatpush1.msra.mxu0 0.0
    %445 = vmatprep.subr.mxu0 0.0
    %446 = vmatpush1.msra.mxu0 0.0
    %447 = vmatprep.mubr.f32.mxu0 0.0
    %448 = vmatmul.mubr.f32.gmra.mrb[0].mxu0 %v283
    %v449 = vpop.f32.mrb[0].mxu0
    %v450 = vadd.f32 %v264, %v449
    %v451 = vpop.f32.mrb[0].mxu0
    %v452 = vadd.f32 %v264, %v451
    %453 = vmatprep.mubr.f32.mxu0 0.0
    %454 = vmatmul.mubr.f32.gmra.mrb[0].mxu0 %v286
    %v455 = vpop.f32.mrb[0].mxu0
    %v456 = vadd.f32 %v269, %v455
    %v457 = vpop.f32.mrb[0].mxu0
    %v458 = vadd.f32 %v269, %v457
    %459 = vmatprep.mubr.f32.mxu0 0.0
    %460 = vmatmul.mubr.f32.gmra.mrb[0].mxu0 %v289
    %v461 = vpop.f32.mrb[0].mxu0
    %v462 = vadd.f32 %v274, %v461
    %v463 = vpop.f32.mrb[0].mxu0
    %v464 = vadd.f32 %v274, %v463
    %465 = vmatprep.mubr.f32.mxu0 0.0
    %466 = vmatmul.mubr.f32.gmra.mrb[0].mxu0 %v292
    %v467 = vpop.f32.mrb[0].mxu0
    %v468 = vadd.f32 %v279, %v467
    %v469 = vpop.f32.mrb[0].mxu0
    %v470 = vadd.f32 %v279, %v469
    %471 = vdwg.mxu0
    %v472 = vtanh.pop %v361
    %v473 = vtanh.pop %v363
    %v474 = vtanh.pop %v450
    %v475 = vtanh.pop %v452
    %v476 = vtanh.pop %v367
    %v477 = vtanh.pop %v369
    %v478 = vtanh.pop %v456
    %v479 = vtanh.pop %v458
    %v480 = vtanh.pop %v373
    %v481 = vtanh.pop %v375
    %v482 = vtanh.pop %v462
    %v483 = vtanh.pop %v464
    %v484 = vtanh.pop %v379
    %v485 = vtanh.pop %v381
    %v486 = vtanh.pop %v468
    %v487 = vtanh.pop %v470
    %489 = vset.pattern.permute.xlu0 0
    %490 = vperm.xlu0 %489, %v59
    %v491 = vpop.permute.xlu0 %490
    %494 = vset.pattern.permute.xlu0 0
    %495 = vperm.xlu0 %494, %v60
    %v496 = vpop.permute.xlu0 %495
    %vm498 = vcmask 261120
    %v500 = vsel %vm498, %v57, 0
    %v503 = vsel %vm498, %v58, 0
    %505 = vmatprep.subr.mxu0 %v473
    %506 = vmatpush1.msra.mxu0 %v472
    %507 = vmatprep.subr.mxu0 %v477
    %508 = vmatpush1.msra.mxu0 %v476
    %509 = vmatprep.subr.mxu0 %v481
    %510 = vmatpush1.msra.mxu0 %v480
    %511 = vmatprep.subr.mxu0 %v485
    %512 = vmatpush1.msra.mxu0 %v484
    %513 = vmatprep.subr.mxu0 0.0
    %514 = vmatpush1.msra.mxu0 0.0
    %515 = vmatprep.subr.mxu0 0.0
    %516 = vmatpush1.msra.mxu0 0.0
    %517 = vmatprep.subr.mxu0 0.0
    %518 = vmatpush1.msra.mxu0 0.0
    %519 = vmatprep.subr.mxu0 0.0
    %520 = vmatpush1.msra.mxu0 0.0
    %521 = vmatprep.subr.mxu0 0.0
    %522 = vmatpush1.msra.mxu0 0.0
    %523 = vmatprep.subr.mxu0 0.0
    %524 = vmatpush1.msra.mxu0 0.0
    %525 = vmatprep.subr.mxu0 0.0
    %526 = vmatpush1.msra.mxu0 0.0
    %527 = vmatprep.subr.mxu0 0.0
    %528 = vmatpush1.msra.mxu0 0.0
    %529 = vmatprep.subr.mxu0 0.0
    %530 = vmatpush1.msra.mxu0 0.0
    %531 = vmatprep.subr.mxu0 0.0
    %532 = vmatpush1.msra.mxu0 0.0
    %533 = vmatprep.subr.mxu0 0.0
    %534 = vmatpush1.msra.mxu0 0.0
    %535 = vmatprep.subr.mxu0 0.0
    %536 = vmatpush1.msra.mxu0 0.0
    %537 = vmatprep.subr.mxu0 0.0
    %538 = vmatpush1.msra.mxu0 0.0
    %539 = vmatprep.subr.mxu0 0.0
    %540 = vmatpush1.msra.mxu0 0.0
    %541 = vmatprep.subr.mxu0 0.0
    %542 = vmatpush1.msra.mxu0 0.0
    %543 = vmatprep.subr.mxu0 0.0
    %544 = vmatpush1.msra.mxu0 0.0
    %545 = vmatprep.subr.mxu0 0.0
    %546 = vmatpush1.msra.mxu0 0.0
    %547 = vmatprep.subr.mxu0 0.0
    %548 = vmatpush1.msra.mxu0 0.0
    %549 = vmatprep.subr.mxu0 0.0
    %550 = vmatpush1.msra.mxu0 0.0
    %551 = vmatprep.subr.mxu0 0.0
    %552 = vmatpush1.msra.mxu0 0.0
    %553 = vmatprep.subr.mxu0 0.0
    %554 = vmatpush1.msra.mxu0 0.0
    %555 = vmatprep.subr.mxu0 0.0
    %556 = vmatpush1.msra.mxu0 0.0
    %557 = vmatprep.subr.mxu0 0.0
    %558 = vmatpush1.msra.mxu0 0.0
    %559 = vmatprep.subr.mxu0 0.0
    %560 = vmatpush1.msra.mxu0 0.0
    %561 = vmatprep.subr.mxu0 0.0
    %562 = vmatpush1.msra.mxu0 0.0
    %563 = vmatprep.subr.mxu0 0.0
    %564 = vmatpush1.msra.mxu0 0.0
    %565 = vmatprep.subr.mxu0 0.0
    %566 = vmatpush1.msra.mxu0 0.0
    %567 = vmatprep.subr.mxu0 0.0
    %568 = vmatpush1.msra.mxu0 0.0
    %569 = vmatprep.mubr.f32.mxu0 0.0
    %570 = vmatmul.mubr.f32.gmra.mrb[0].mxu0 %v500
    %v571 = vpop.f32.mrb[0].mxu0
    %v572 = vadd.f32 %v491, %v571
    %v573 = vpop.f32.mrb[0].mxu0
    %v574 = vadd.f32 %v491, %v573
    %575 = vmatprep.mubr.f32.mxu0 0.0
    %576 = vmatmul.mubr.f32.gmra.mrb[0].mxu0 %v503
    %v577 = vpop.f32.mrb[0].mxu0
    %v578 = vadd.f32 %v496, %v577
    %v579 = vpop.f32.mrb[0].mxu0
    %v580 = vadd.f32 %v496, %v579
    %581 = vdwg.mxu0
    %582 = vmatprep.subr.mxu0 %v475
    %583 = vmatpush1.msra.mxu0 %v474
    %584 = vmatprep.subr.mxu0 %v479
    %585 = vmatpush1.msra.mxu0 %v478
    %586 = vmatprep.subr.mxu0 %v483
    %587 = vmatpush1.msra.mxu0 %v482
    %588 = vmatprep.subr.mxu0 %v487
    %589 = vmatpush1.msra.mxu0 %v486
    %590 = vmatprep.subr.mxu0 0.0
    %591 = vmatpush1.msra.mxu0 0.0
    %592 = vmatprep.subr.mxu0 0.0
    %593 = vmatpush1.msra.mxu0 0.0
    %594 = vmatprep.subr.mxu0 0.0
    %595 = vmatpush1.msra.mxu0 0.0
    %596 = vmatprep.subr.mxu0 0.0
    %597 = vmatpush1.msra.mxu0 0.0
    %598 = vmatprep.subr.mxu0 0.0
    %599 = vmatpush1.msra.mxu0 0.0
    %600 = vmatprep.subr.mxu0 0.0
    %601 = vmatpush1.msra.mxu0 0.0
    %602 = vmatprep.subr.mxu0 0.0
    %603 = vmatpush1.msra.mxu0 0.0
    %604 = vmatprep.subr.mxu0 0.0
    %605 = vmatpush1.msra.mxu0 0.0
    %606 = vmatprep.subr.mxu0 0.0
    %607 = vmatpush1.msra.mxu0 0.0
    %608 = vmatprep.subr.mxu0 0.0
    %609 = vmatpush1.msra.mxu0 0.0
    %610 = vmatprep.subr.mxu0 0.0
    %611 = vmatpush1.msra.mxu0 0.0
    %612 = vmatprep.subr.mxu0 0.0
    %613 = vmatpush1.msra.mxu0 0.0
    %614 = vmatprep.subr.mxu0 0.0
    %615 = vmatpush1.msra.mxu0 0.0
    %616 = vmatprep.subr.mxu0 0.0
    %617 = vmatpush1.msra.mxu0 0.0
    %618 = vmatprep.subr.mxu0 0.0
    %619 = vmatpush1.msra.mxu0 0.0
    %620 = vmatprep.subr.mxu0 0.0
    %621 = vmatpush1.msra.mxu0 0.0
    %622 = vmatprep.subr.mxu0 0.0
    %623 = vmatpush1.msra.mxu0 0.0
    %624 = vmatprep.subr.mxu0 0.0
    %625 = vmatpush1.msra.mxu0 0.0
    %626 = vmatprep.subr.mxu0 0.0
    %627 = vmatpush1.msra.mxu0 0.0
    %628 = vmatprep.subr.mxu0 0.0
    %629 = vmatpush1.msra.mxu0 0.0
    %630 = vmatprep.subr.mxu0 0.0
    %631 = vmatpush1.msra.mxu0 0.0
    %632 = vmatprep.subr.mxu0 0.0
    %633 = vmatpush1.msra.mxu0 0.0
    %634 = vmatprep.subr.mxu0 0.0
    %635 = vmatpush1.msra.mxu0 0.0
    %636 = vmatprep.subr.mxu0 0.0
    %637 = vmatpush1.msra.mxu0 0.0
    %638 = vmatprep.subr.mxu0 0.0
    %639 = vmatpush1.msra.mxu0 0.0
    %640 = vmatprep.subr.mxu0 0.0
    %641 = vmatpush1.msra.mxu0 0.0
    %642 = vmatprep.subr.mxu0 0.0
    %643 = vmatpush1.msra.mxu0 0.0
    %644 = vmatprep.subr.mxu0 0.0
    %645 = vmatpush1.msra.mxu0 0.0
    %646 = vmatprep.mubr.f32.mxu0 0.0
    %647 = vmatmul.mubr.f32.gmra.mrb[0].mxu0 %v500
    %v648 = vpop.f32.mrb[0].mxu0
    %v649 = vadd.f32 %v491, %v648
    %v650 = vpop.f32.mrb[0].mxu0
    %v651 = vadd.f32 %v491, %v650
    %652 = vmatprep.mubr.f32.mxu0 0.0
    %653 = vmatmul.mubr.f32.gmra.mrb[0].mxu0 %v503
    %v654 = vpop.f32.mrb[0].mxu0
    %v655 = vadd.f32 %v496, %v654
    %v656 = vpop.f32.mrb[0].mxu0
    %v657 = vadd.f32 %v496, %v656
    %658 = vdwg.mxu0
    %v659 = vtanh.pop %v572
    %v660 = vtanh.pop %v574
    %v661 = vtanh.pop %v649
    %v662 = vtanh.pop %v651
    %v663 = vtanh.pop %v578
    %v664 = vtanh.pop %v580
    %v665 = vtanh.pop %v655
    %v666 = vtanh.pop %v657
    %668 = vset.pattern.permute.xlu0 0
    %669 = vperm.xlu0 %668, %v62
    %v670 = vpop.permute.xlu0 %669
    %vm672 = vcmask 130048
    %v674 = vsel %vm672, %v61, 0
    %676 = vmatprep.subr.mxu0 %v660
    %677 = vmatpush1.msra.mxu0 %v659
    %678 = vmatprep.subr.mxu0 %v664
    %679 = vmatpush1.msra.mxu0 %v663
    %680 = vmatprep.subr.mxu0 0.0
    %681 = vmatpush1.msra.mxu0 0.0
    %682 = vmatprep.subr.mxu0 0.0
    %683 = vmatpush1.msra.mxu0 0.0
    %684 = vmatprep.subr.mxu0 0.0
    %685 = vmatpush1.msra.mxu0 0.0
    %686 = vmatprep.subr.mxu0 0.0
    %687 = vmatpush1.msra.mxu0 0.0
    %688 = vmatprep.subr.mxu0 0.0
    %689 = vmatpush1.msra.mxu0 0.0
    %690 = vmatprep.subr.mxu0 0.0
    %691 = vmatpush1.msra.mxu0 0.0
    %692 = vmatprep.subr.mxu0 0.0
    %693 = vmatpush1.msra.mxu0 0.0
    %694 = vmatprep.subr.mxu0 0.0
    %695 = vmatpush1.msra.mxu0 0.0
    %696 = vmatprep.subr.mxu0 0.0
    %697 = vmatpush1.msra.mxu0 0.0
    %698 = vmatprep.subr.mxu0 0.0
    %699 = vmatpush1.msra.mxu0 0.0
    %700 = vmatprep.subr.mxu0 0.0
    %701 = vmatpush1.msra.mxu0 0.0
    %702 = vmatprep.subr.mxu0 0.0
    %703 = vmatpush1.msra.mxu0 0.0
    %704 = vmatprep.subr.mxu0 0.0
    %705 = vmatpush1.msra.mxu0 0.0
    %706 = vmatprep.subr.mxu0 0.0
    %707 = vmatpush1.msra.mxu0 0.0
    %708 = vmatprep.subr.mxu0 0.0
    %709 = vmatpush1.msra.mxu0 0.0
    %710 = vmatprep.subr.mxu0 0.0
    %711 = vmatpush1.msra.mxu0 0.0
    %712 = vmatprep.subr.mxu0 0.0
    %713 = vmatpush1.msra.mxu0 0.0
    %714 = vmatprep.subr.mxu0 0.0
    %715 = vmatpush1.msra.mxu0 0.0
    %716 = vmatprep.subr.mxu0 0.0
    %717 = vmatpush1.msra.mxu0 0.0
    %718 = vmatprep.subr.mxu0 0.0
    %719 = vmatpush1.msra.mxu0 0.0
    %720 = vmatprep.subr.mxu0 0.0
    %721 = vmatpush1.msra.mxu0 0.0
    %722 = vmatprep.subr.mxu0 0.0
    %723 = vmatpush1.msra.mxu0 0.0
    %724 = vmatprep.subr.mxu0 0.0
    %725 = vmatpush1.msra.mxu0 0.0
    %726 = vmatprep.subr.mxu0 0.0
    %727 = vmatpush1.msra.mxu0 0.0
    %728 = vmatprep.subr.mxu0 0.0
    %729 = vmatpush1.msra.mxu0 0.0
    %730 = vmatprep.subr.mxu0 0.0
    %731 = vmatpush1.msra.mxu0 0.0
    %732 = vmatprep.subr.mxu0 0.0
    %733 = vmatpush1.msra.mxu0 0.0
    %734 = vmatprep.subr.mxu0 0.0
    %735 = vmatpush1.msra.mxu0 0.0
    %736 = vmatprep.subr.mxu0 0.0
    %737 = vmatpush1.msra.mxu0 0.0
    %738 = vmatprep.subr.mxu0 0.0
    %739 = vmatpush1.msra.mxu0 0.0
    %740 = vmatprep.mubr.f32.mxu0 0.0
    %741 = vmatmul.mubr.f32.gmra.mrb[0].mxu0 %v674
    %v742 = vpop.f32.mrb[0].mxu0
    %v743 = vadd.f32 %v670, %v742
    %v744 = vpop.f32.mrb[0].mxu0
    %v745 = vadd.f32 %v670, %v744
    %746 = vdwg.mxu0
    %747 = vmatprep.subr.mxu0 %v662
    %748 = vmatpush1.msra.mxu0 %v661
    %749 = vmatprep.subr.mxu0 %v666
    %750 = vmatpush1.msra.mxu0 %v665
    %751 = vmatprep.subr.mxu0 0.0
    %752 = vmatpush1.msra.mxu0 0.0
    %753 = vmatprep.subr.mxu0 0.0
    %754 = vmatpush1.msra.mxu0 0.0
    %755 = vmatprep.subr.mxu0 0.0
    %756 = vmatpush1.msra.mxu0 0.0
    %757 = vmatprep.subr.mxu0 0.0
    %758 = vmatpush1.msra.mxu0 0.0
    %759 = vmatprep.subr.mxu0 0.0
    %760 = vmatpush1.msra.mxu0 0.0
    %761 = vmatprep.subr.mxu0 0.0
    %762 = vmatpush1.msra.mxu0 0.0
    %763 = vmatprep.subr.mxu0 0.0
    %764 = vmatpush1.msra.mxu0 0.0
    %765 = vmatprep.subr.mxu0 0.0
    %766 = vmatpush1.msra.mxu0 0.0
    %767 = vmatprep.subr.mxu0 0.0
    %768 = vmatpush1.msra.mxu0 0.0
    %769 = vmatprep.subr.mxu0 0.0
    %770 = vmatpush1.msra.mxu0 0.0
    %771 = vmatprep.subr.mxu0 0.0
    %772 = vmatpush1.msra.mxu0 0.0
    %773 = vmatprep.subr.mxu0 0.0
    %774 = vmatpush1.msra.mxu0 0.0
    %775 = vmatprep.subr.mxu0 0.0
    %776 = vmatpush1.msra.mxu0 0.0
    %777 = vmatprep.subr.mxu0 0.0
    %778 = vmatpush1.msra.mxu0 0.0
    %779 = vmatprep.subr.mxu0 0.0
    %780 = vmatpush1.msra.mxu0 0.0
    %781 = vmatprep.subr.mxu0 0.0
    %782 = vmatpush1.msra.mxu0 0.0
    %783 = vmatprep.subr.mxu0 0.0
    %784 = vmatpush1.msra.mxu0 0.0
    %785 = vmatprep.subr.mxu0 0.0
    %786 = vmatpush1.msra.mxu0 0.0
    %787 = vmatprep.subr.mxu0 0.0
    %788 = vmatpush1.msra.mxu0 0.0
    %789 = vmatprep.subr.mxu0 0.0
    %790 = vmatpush1.msra.mxu0 0.0
    %791 = vmatprep.subr.mxu0 0.0
    %792 = vmatpush1.msra.mxu0 0.0
    %793 = vmatprep.subr.mxu0 0.0
    %794 = vmatpush1.msra.mxu0 0.0
    %795 = vmatprep.subr.mxu0 0.0
    %796 = vmatpush1.msra.mxu0 0.0
    %797 = vmatprep.subr.mxu0 0.0
    %798 = vmatpush1.msra.mxu0 0.0
    %799 = vmatprep.subr.mxu0 0.0
    %800 = vmatpush1.msra.mxu0 0.0
    %801 = vmatprep.subr.mxu0 0.0
    %802 = vmatpush1.msra.mxu0 0.0
    %803 = vmatprep.subr.mxu0 0.0
    %804 = vmatpush1.msra.mxu0 0.0
    %805 = vmatprep.subr.mxu0 0.0
    %806 = vmatpush1.msra.mxu0 0.0
    %807 = vmatprep.subr.mxu0 0.0
    %808 = vmatpush1.msra.mxu0 0.0
    %809 = vmatprep.subr.mxu0 0.0
    %810 = vmatpush1.msra.mxu0 0.0
    %811 = vmatprep.mubr.f32.mxu0 0.0
    %812 = vmatmul.mubr.f32.gmra.mrb[0].mxu0 %v674
    %v813 = vpop.f32.mrb[0].mxu0
    %v814 = vadd.f32 %v670, %v813
    %v815 = vpop.f32.mrb[0].mxu0
    %v816 = vadd.f32 %v670, %v815
    %817 = vdwg.mxu0
    %v822 = vcombine.low %v743, %v745
    %v823 = vcombine.low %v814, %v816
    %826 = vst [vmem:[#allocation2] sm:$0xff] %v822
    %827 = vst [vmem:[#allocation2 + $0x8] sm:$0xff] %v823
    // Predicated region
    $region38: #{tpu_custom_call.1} parent=1 // pred_check
      _
    $region39: #{tpu_custom_call.1} parent=1 // pred_check_branch
      %829 = sbr.rel (0) target = $region41
    $region40: #{tpu_custom_call.1} parent=1 // pred_region
      %s831 = ssub.s32 256, 256
      %832 = vsyncadd [#allocation3], %s831
      %s834 = sshll.u32 [#allocation2], 4
      %s835 = int_to_ptr.vmem [resolvable:$true] %s834
      %837 = dma.vmem_to_hbm [thread:$0]  %s835, 256, %s9, [#allocation3]
    $region41: #{tpu_custom_call.1} parent=1 // pred_fallthru
      _
    // Predicated region
    $region42: #{tpu_custom_call.1} parent=1 // pred_check
      _
    $region43: #{tpu_custom_call.1} parent=1 // pred_check_branch
      %839 = sbr.rel (0) target = $region45
    $region44: #{tpu_custom_call.1} parent=1 // pred_region
      %840 = dma.done [#allocation3], 256
    $region45: #{tpu_custom_call.1} parent=1 // pred_fallthru
      _
    %841 = vsyncpa [#allocation3], 1

</llo_original>
